<compile_context>
chip_gen: v7x
topology: tpu7x:2x2x1
jax: 0.10.0
libtpu: 0.0.40
codegen_flags: <defaults>
</compile_context>

<pallas_src>
import jax
import jax.numpy as jnp
from jax.experimental import pallas as pl
from jax.experimental.pallas import tpu as pltpu

_SUBLANE = 8                         # f32 sublane count
_TINY_BATCH = 64                     # below this, fused XLA dot beats the custom call
_TB_CAP = 1024                       # diminishing returns past ~512-1024 rows/tile
_VMEM_TILE_BUDGET = 12 * 1024 * 1024 # conservative across v5e(16MiB scoped)/v6e/v7x(64MiB phys)


def _round_up(x, m):
    return (x + m - 1) // m * m


def _action_layer_kernel(x_ref, w_ref, b_ref, o_ref):
    # x_ref: (TB, A)   batch tile
    # w_ref: (A, H)    VMEM-resident across grid steps (constant index_map)
    # b_ref: (1, H)    VMEM-resident across grid steps
    # o_ref: (TB, H)   exact-width output tile (masked vst for H < 128 is fine;
    #                  far cheaper than 4x HBM write amplification)
    y = jnp.dot(x_ref[...], w_ref[...], preferred_element_type=jnp.float32)
    o_ref[...] = (y + b_ref[...]).astype(o_ref.dtype)


def init_action_layer_params(key, action_size, hidden_size):
    """Matches the PyTorch module __init__ (xavier_uniform_ weight of shape
    (hidden_size, action_size), zero bias).  Also returns the weight
    pre-transposed to (action_size, hidden_size) and the bias as a (1, H) row
    so the forward pass never transposes / reshapes parameters."""
    bound = jnp.sqrt(6.0 / (action_size + hidden_size))
    weight = jax.random.uniform(  # PyTorch layout: (hidden, action)
        key, (hidden_size, action_size), dtype=jnp.float32,
        minval=-bound, maxval=bound)
    bias = jnp.zeros((hidden_size,), dtype=jnp.float32)
    w_t = jnp.transpose(weight)       # (A, H), transposed once at init
    b_row = bias[None, :]             # (1, H)
    return weight, bias, w_t, b_row


def _pick_tile_batch(batch, action_size, hidden_size):
    if batch <= _SUBLANE:
        return batch                  # single block == full batch dim (legal)
    # Double-buffered x + out tiles must fit the VMEM budget alongside the
    # (conservatively double-buffered) resident weight/bias.
    per_row = 4 * 2 * (action_size + hidden_size)
    fixed = 4 * 2 * (action_size * hidden_size + hidden_size)
    tb = max(_SUBLANE, (_VMEM_TILE_BUDGET - fixed) // per_row)
    tb = min(tb, _TB_CAP)
    # >= 2 grid steps so the "parallel" batch axis shards across v7x's 2 TCs.
    tb = min(tb, _round_up((batch + 1) // 2, _SUBLANE))
    tb = max(_SUBLANE, (tb // _SUBLANE) * _SUBLANE)   # sublane-aligned
    return int(tb)


def action_layer_forward(action, w_t, b_row, *, force_pallas=False):
    """Forward pass of ActionLayer: y = x @ W^T + b.

    action: (batch, action_size) or (action_size,) float32
            (1-D input gets a batch dim, matching make_it_batched_torch_tensor)
    w_t:    (action_size, hidden_size) float32   pre-transposed weight
    b_row:  (1, hidden_size)           float32
    returns (batch, hidden_size) float32
    """
    x = jnp.asarray(action, jnp.float32)
    if x.ndim == 1:
        x = x[None, :]
    batch, action_size = x.shape
    a_dim, hidden_size = w_t.shape
    assert a_dim == action_size

    # Tiny-batch fast path: pure fixed overhead territory for a custom call;
    # let XLA fuse the dot+add with neighbouring ops instead.
    if batch <= _TINY_BATCH and not force_pallas:
        return x @ w_t + b_row

    tb = _pick_tile_batch(batch, action_size, hidden_size)
    grid = (pl.cdiv(batch, tb),)

    # Explicit scoped-VMEM limit with headroom (double-buffered tiles + params).
    vmem_needed = 4 * (2 * tb * (action_size + hidden_size)
                       + 2 * (action_size * hidden_size + hidden_size))
    vmem_limit = int(min(max(2 * vmem_needed, 4 << 20), 64 << 20))

    cost = pl.CostEstimate(
        flops=2 * batch * action_size * hidden_size + batch * hidden_size,
        transcendentals=0,
        bytes_accessed=4 * (batch * action_size          # x
                            + action_size * hidden_size  # weight
                            + hidden_size                # bias
                            + batch * hidden_size),      # out
    )

    out = pl.pallas_call(
        _action_layer_kernel,
        out_shape=jax.ShapeDtypeStruct((batch, hidden_size), jnp.float32),
        grid_spec=pltpu.PrefetchScalarGridSpec(
            num_scalar_prefetch=0,
            grid=grid,
            in_specs=[
                pl.BlockSpec((tb, action_size), lambda i: (i, 0)),
                pl.BlockSpec((action_size, hidden_size), lambda i: (0, 0)),  # resident
                pl.BlockSpec((1, hidden_size), lambda i: (0, 0)),            # resident
            ],
            out_specs=pl.BlockSpec((tb, hidden_size), lambda i: (i, 0)),
        ),
        compiler_params=pltpu.CompilerParams(
            dimension_semantics=("parallel",),
            vmem_limit_bytes=vmem_limit,
        ),
        cost_estimate=cost,
    )(x, w_t, b_row)
    return out
    # TODO(synk): return_stat=True in the PyTorch module returns an empty dict
    # alongside x; callers needing it can wrap this function trivially.


if __name__ == "__main__":
    key = jax.random.PRNGKey(0)
    k_w, k_x = jax.random.split(key)

    action_size = 4
    hidden_size = 32

    weight, bias, w_t, b_row = init_action_layer_params(
        k_w, action_size, hidden_size)

    # --- module-consistent small shape: batch=2 ------------------------------
    batch = 2
    action = jax.random.normal(k_x, (batch, action_size), dtype=jnp.float32)
    ref = action @ weight.T + bias[None, :]

    # Default path (tiny-batch fused fallback).
    out = action_layer_forward(action, w_t, b_row)
    jax.block_until_ready(out)
    assert out.shape == (batch, hidden_size)
    assert jnp.allclose(out, ref, atol=1e-5, rtol=1e-5)

    # Same small shape, forced through the Pallas kernel.
    out_k = action_layer_forward(action, w_t, b_row, force_pallas=True)
    jax.block_until_ready(out_k)
    assert out_k.shape == (batch, hidden_size)
    assert jnp.allclose(out_k, ref, atol=1e-5, rtol=1e-5)

    # 1-D (unbatched) input path of make_it_batched_torch_tensor.
    out1 = action_layer_forward(action[0], w_t, b_row)
    jax.block_until_ready(out1)
    assert out1.shape == (1, hidden_size)
    assert jnp.allclose(out1[0], ref[0], atol=1e-5, rtol=1e-5)

    # --- larger ragged batch: exercises the tiled Pallas path + masked last
    #     block (batch=200 is not a multiple of the tile) ----------------------
    big_batch = 200
    action_big = jax.random.normal(
        jax.random.PRNGKey(1), (big_batch, action_size), dtype=jnp.float32)
    ref_big = action_big @ weight.T + bias[None, :]
    out_big = action_layer_forward(action_big, w_t, b_row)
    jax.block_until_ready(out_big)
    assert out_big.shape == (big_batch, hidden_size)
    assert jnp.allclose(out_big, ref_big, atol=1e-5, rtol=1e-5)

    print("KERNEL_OK")
</pallas_src>

<mosaic_0001>
module attributes {stable_mosaic.version = 11 : i64} {
  func.func @_action_layer_kernel(%arg0: i32, %arg1: memref<2x4xf32, #tpu.memory_space<vmem>>, %arg2: memref<4x32xf32, #tpu.memory_space<vmem>>, %arg3: memref<1x32xf32, #tpu.memory_space<vmem>>, %arg4: memref<2x32xf32, #tpu.memory_space<vmem>>) attributes {dimension_semantics = [#tpu.dimension_semantics<parallel>], iteration_bounds = array<i64: 1>, scalar_prefetch = 0 : i64, scratch_operands = 0 : i64, tpu.core_type = #tpu.core_type<tc>, window_params = [{transform_indices = @transform_0, window_bounds = array<i64: 2, 4>}, {pipeline_mode = #tpu.pipeline_mode<synchronous>, transform_indices = @transform_1, window_bounds = array<i64: 4, 32>}, {pipeline_mode = #tpu.pipeline_mode<synchronous>, transform_indices = @transform_2, window_bounds = array<i64: 1, 32>}, {transform_indices = @transform_3, window_bounds = array<i64: 2, 32>}]} {
    %c0 = arith.constant 0 : index
    %c0_0 = arith.constant 0 : index
    %0 = vector.load %arg1[%c0, %c0_0] : memref<2x4xf32, #tpu.memory_space<vmem>>, vector<2x4xf32>
    %c0_1 = arith.constant 0 : index
    %c0_2 = arith.constant 0 : index
    %1 = vector.load %arg2[%c0_1, %c0_2] : memref<4x32xf32, #tpu.memory_space<vmem>>, vector<4x32xf32>
    %cst = arith.constant dense<0.000000e+00> : vector<2x32xf32>
    %2 = tpu.matmul %0, %1, %cst {dimension_numbers = #tpu.dot_dimension_numbers<[1], [0], [0], [1], [0, 0, 1, 1], [], []>} : vector<2x4xf32>, vector<4x32xf32>, vector<2x32xf32> -> vector<2x32xf32>
    %c0_3 = arith.constant 0 : index
    %c0_4 = arith.constant 0 : index
    %3 = vector.load %arg3[%c0_3, %c0_4] : memref<1x32xf32, #tpu.memory_space<vmem>>, vector<1x32xf32>
    %4 = vector.broadcast %3 : vector<1x32xf32> to vector<2x32xf32>
    %5 = arith.addf %2, %4 : vector<2x32xf32>
    %c0_5 = arith.constant 0 : index
    %c0_6 = arith.constant 0 : index
    %6 = vector.load %arg4[%c0_5, %c0_6] : memref<2x32xf32, #tpu.memory_space<vmem>>, vector<2x32xf32>
    tpu.vector_store %arg4[%c0_5, %c0_6], %5 {strides = array<i32>} : memref<2x32xf32, #tpu.memory_space<vmem>>, vector<2x32xf32>,
    return
  }
  func.func @transform_0(%arg0: i32) -> (i32, i32) {
    %c0_i32 = arith.constant 0 : i32
    %c0_i32_0 = arith.constant 0 : i32
    return %arg0, %c0_i32 : i32, i32
  }
  func.func @transform_1(%arg0: i32) -> (i32, i32) {
    %c0_i32 = arith.constant 0 : i32
    %c0_i32_0 = arith.constant 0 : i32
    %c0_i32_1 = arith.constant 0 : i32
    return %c0_i32, %c0_i32_0 : i32, i32
  }
  func.func @transform_2(%arg0: i32) -> (i32, i32) {
    %c0_i32 = arith.constant 0 : i32
    %c0_i32_0 = arith.constant 0 : i32
    %c0_i32_1 = arith.constant 0 : i32
    return %c0_i32, %c0_i32_0 : i32, i32
  }
  func.func @transform_3(%arg0: i32) -> (i32, i32) {
    %c0_i32 = arith.constant 0 : i32
    %c0_i32_0 = arith.constant 0 : i32
    return %arg0, %c0_i32 : i32, i32
  }
}

</mosaic_0001>

<llo_original>
// kernel: tpu_custom_call.1
$region0: #{tpu_custom_call.1}
  #allocation0 [shape = 'u32[]', space=smem, size = 0x4, offset = 0x4, fixed_abs, tag = 'smem constant byte address 0x4 - core index']
  #allocation1 [shape = 'u32[144,128]{1,0:T(1,128)}', space=vmem, size = 0x12000, scoped, tag = 'internal scratch']
  %s0 = inlined_call_operand.hbm [shape: f32[2,4], index: 0, kind: input, shape index: {}]
  %s1 = inlined_call_operand.hbm [shape: f32[4,32], index: 1, kind: input, shape index: {}]
  %s2 = inlined_call_operand.vmem [shape: f32[1,32], index: 2, kind: input, shape index: {}]
  %s3 = inlined_call_operand.hbm [shape: f32[2,32], index: 3, kind: output, shape index: {}]
  %s4 = sld [smem:[#allocation0]]
  $region30: #{tpu_custom_call.1} parent=0
    _
  %s6 = ssub.s32 1, %s4
  %s7 = scalar_select 0, %s6, %s4
  $region1: #{tpu_custom_call.1} parent=0
    #allocation2 [shape = 'u8[1024]{0}', space=vmem, size = 0x400, scoped, tag = 'input window, operand 0, single buffered']
    #allocation3 [shape = 's32[1]{0}', space=sflag, size = 0x4, scoped, tag = 'scoped memory for tpu_custom_call.1']
    #allocation4 [shape = 's32[1]{0}', space=sflag, size = 0x4, scoped, tag = 'scoped memory for tpu_custom_call.1']
    #allocation5 [shape = 'u8[2048]{0}', space=vmem, size = 0x800, scoped, tag = 'input window, operand 1, single buffered']
    #allocation6 [shape = 's32[1]{0}', space=sflag, size = 0x4, scoped, tag = 'scoped memory for tpu_custom_call.1']
    #allocation7 [shape = 'u8[1024]{0}', space=vmem, size = 0x400, scoped, tag = 'output window, operand 0, single buffered']
    %8 = vsyncpa [#allocation3], 0
    %9 = vsyncpa [#allocation6], 0
    %10 = vsyncpa [#allocation4], 0
    // Predicated region
    $region2: #{tpu_custom_call.1} parent=1 // pred_check
      _
    $region3: #{tpu_custom_call.1} parent=1 // pred_check_branch
      %12 = sbr.rel (0) target = $region5
    $region4: #{tpu_custom_call.1} parent=1 // pred_region
      %s14 = ssub.s32 32, 32
      %15 = vsyncadd [#allocation3], %s14
      %s17 = sshll.u32 [#allocation2], 4
      %s18 = int_to_ptr.vmem [resolvable:$true] %s17
      %20 = dma.hbm_to_vmem [thread:$0]  %s0, 32, %s18, [#allocation3]
    $region5: #{tpu_custom_call.1} parent=1 // pred_fallthru
      _
    // Predicated region
    $region6: #{tpu_custom_call.1} parent=1 // pred_check
      _
    $region7: #{tpu_custom_call.1} parent=1 // pred_check_branch
      %22 = sbr.rel (0) target = $region9
    $region8: #{tpu_custom_call.1} parent=1 // pred_region
      %s24 = ssub.s32 64, 64
      %25 = vsyncadd [#allocation6], %s24
      %s27 = sshll.u32 [#allocation5], 4
      %s28 = int_to_ptr.vmem [resolvable:$true] %s27
      %30 = dma.hbm_to_vmem [thread:$0]  %s1, 64, %s28, [#allocation6]
    $region9: #{tpu_custom_call.1} parent=1 // pred_fallthru
      _
    // Predicated region
    $region10: #{tpu_custom_call.1} parent=1 // pred_check
      _
    $region11: #{tpu_custom_call.1} parent=1 // pred_check_branch
      %32 = sbr.rel (0) target = $region13
    $region12: #{tpu_custom_call.1} parent=1 // pred_region
      _
    $region13: #{tpu_custom_call.1} parent=1 // pred_fallthru
      _
    // Predicated region
    $region14: #{tpu_custom_call.1} parent=1 // pred_check
      _
    $region15: #{tpu_custom_call.1} parent=1 // pred_check_branch
      %34 = sbr.rel (0) target = $region17
    $region16: #{tpu_custom_call.1} parent=1 // pred_region
      %35 = dma.done [#allocation3], 32
    $region17: #{tpu_custom_call.1} parent=1 // pred_fallthru
      _
    // Predicated region
    $region18: #{tpu_custom_call.1} parent=1 // pred_check
      _
    $region19: #{tpu_custom_call.1} parent=1 // pred_check_branch
      %37 = sbr.rel (0) target = $region21
    $region20: #{tpu_custom_call.1} parent=1 // pred_region
      %38 = dma.done [#allocation6], 64
    $region21: #{tpu_custom_call.1} parent=1 // pred_fallthru
      _
    %v39 = vld [vmem:[#allocation2] sm:$0x3]
    %v40 = vld [vmem:[#allocation5] sm:$0xf]
    %v41 = vld [vmem:[%s2] sm:$0x1]
    %v43 = vlaneseq
    %v44 = vshrl.u32 %v43, 7
    %v45 = vsub.s32 0, %v44
    %v46 = vrot.slane %v41, %v45
    %vm48 = vcmask 31744
    %v50 = vsel %vm48, %v39, 0
    %vm52 = vcmask 1043456
    %v54 = vsel %vm52, %v40, 0
    %56 = vmatprep.subr.mxu0 0.0
    %57 = vmatpush1.msra.mxu0 %v54
    %58 = vmatprep.subr.mxu0 0.0
    %59 = vmatpush1.msra.mxu0 0.0
    %60 = vmatprep.subr.mxu0 0.0
    %61 = vmatpush1.msra.mxu0 0.0
    %62 = vmatprep.subr.mxu0 0.0
    %63 = vmatpush1.msra.mxu0 0.0
    %64 = vmatprep.subr.mxu0 0.0
    %65 = vmatpush1.msra.mxu0 0.0
    %66 = vmatprep.subr.mxu0 0.0
    %67 = vmatpush1.msra.mxu0 0.0
    %68 = vmatprep.subr.mxu0 0.0
    %69 = vmatpush1.msra.mxu0 0.0
    %70 = vmatprep.subr.mxu0 0.0
    %71 = vmatpush1.msra.mxu0 0.0
    %72 = vmatprep.subr.mxu0 0.0
    %73 = vmatpush1.msra.mxu0 0.0
    %74 = vmatprep.subr.mxu0 0.0
    %75 = vmatpush1.msra.mxu0 0.0
    %76 = vmatprep.subr.mxu0 0.0
    %77 = vmatpush1.msra.mxu0 0.0
    %78 = vmatprep.subr.mxu0 0.0
    %79 = vmatpush1.msra.mxu0 0.0
    %80 = vmatprep.subr.mxu0 0.0
    %81 = vmatpush1.msra.mxu0 0.0
    %82 = vmatprep.subr.mxu0 0.0
    %83 = vmatpush1.msra.mxu0 0.0
    %84 = vmatprep.subr.mxu0 0.0
    %85 = vmatpush1.msra.mxu0 0.0
    %86 = vmatprep.subr.mxu0 0.0
    %87 = vmatpush1.msra.mxu0 0.0
    %88 = vmatprep.subr.mxu0 0.0
    %89 = vmatpush1.msra.mxu0 0.0
    %90 = vmatprep.subr.mxu0 0.0
    %91 = vmatpush1.msra.mxu0 0.0
    %92 = vmatprep.subr.mxu0 0.0
    %93 = vmatpush1.msra.mxu0 0.0
    %94 = vmatprep.subr.mxu0 0.0
    %95 = vmatpush1.msra.mxu0 0.0
    %96 = vmatprep.subr.mxu0 0.0
    %97 = vmatpush1.msra.mxu0 0.0
    %98 = vmatprep.subr.mxu0 0.0
    %99 = vmatpush1.msra.mxu0 0.0
    %100 = vmatprep.subr.mxu0 0.0
    %101 = vmatpush1.msra.mxu0 0.0
    %102 = vmatprep.subr.mxu0 0.0
    %103 = vmatpush1.msra.mxu0 0.0
    %104 = vmatprep.subr.mxu0 0.0
    %105 = vmatpush1.msra.mxu0 0.0
    %106 = vmatprep.subr.mxu0 0.0
    %107 = vmatpush1.msra.mxu0 0.0
    %108 = vmatprep.subr.mxu0 0.0
    %109 = vmatpush1.msra.mxu0 0.0
    %110 = vmatprep.subr.mxu0 0.0
    %111 = vmatpush1.msra.mxu0 0.0
    %112 = vmatprep.subr.mxu0 0.0
    %113 = vmatpush1.msra.mxu0 0.0
    %114 = vmatprep.subr.mxu0 0.0
    %115 = vmatpush1.msra.mxu0 0.0
    %116 = vmatprep.subr.mxu0 0.0
    %117 = vmatpush1.msra.mxu0 0.0
    %118 = vmatprep.subr.mxu0 0.0
    %119 = vmatpush1.msra.mxu0 0.0
    %120 = vmatprep.mubr.f32.mxu0 0.0
    %121 = vmatmul.mubr.f32.gmra.mrb[0].mxu0 %v50
    %v122 = vpop.f32.mrb[0].mxu0
    %v123 = vadd.f32 %v46, %v122
    %v124 = vpop.f32.mrb[0].mxu0
    %125 = vdwg.mxu0
    %vm126 = vcmask 254976
    %127 = vst.msk [vmem:[#allocation7] sm:$0x3] %vm126, %v123
    // Predicated region
    $region22: #{tpu_custom_call.1} parent=1 // pred_check
      _
    $region23: #{tpu_custom_call.1} parent=1 // pred_check_branch
      %129 = sbr.rel (0) target = $region25
    $region24: #{tpu_custom_call.1} parent=1 // pred_region
      %s131 = ssub.s32 32, 32
      %132 = vsyncadd [#allocation4], %s131
      %s134 = sshll.u32 [#allocation7], 4
      %s135 = int_to_ptr.vmem [resolvable:$true] %s134
      %137 = dma.vmem_to_hbm [thread:$0]  %s135, 32, %s3, [#allocation4]
    $region25: #{tpu_custom_call.1} parent=1 // pred_fallthru
      _
    // Predicated region
    $region26: #{tpu_custom_call.1} parent=1 // pred_check
      _
    $region27: #{tpu_custom_call.1} parent=1 // pred_check_branch
      %139 = sbr.rel (0) target = $region29
    $region28: #{tpu_custom_call.1} parent=1 // pred_region
      %140 = dma.done [#allocation4], 32
    $region29: #{tpu_custom_call.1} parent=1 // pred_fallthru
      _
    %141 = vsyncpa [#allocation3], 1
    %142 = vsyncpa [#allocation6], 1
    %143 = vsyncpa [#allocation4], 1

</llo_original>
